<compile_context>
chip_gen: v7x
topology: tpu7x:2x2x1
jax: 0.10.0
libtpu: 0.0.40
codegen_flags: <defaults>
</compile_context>

<pallas_src>
import functools

import jax
import jax.numpy as jnp
from jax.experimental import pallas as pl
from jax.experimental.pallas import tpu as pltpu


HEAD_OUT = 128          # lane-dense fused head output width (policy|value|nego|pad)
NEGO_DIM = 10


# ----------------------------------------------------------------------------
# Pallas kernel: (TM, S) batch tile -> 2-layer MLP -> fused 128-lane head
# bf16 MXU operands, f32 accumulation / bias / ReLU, f32 lane-dense output.
# ----------------------------------------------------------------------------
def _mlp_fused_kernel(x_ref, w1_ref, b1_ref, w2_ref, b2_ref, wh_ref, bh_ref,
                      out_ref):
    x = x_ref[...].astype(jnp.bfloat16)                              # (TM, S)

    # trunk: Linear(S,S) -> ReLU -> Linear(S,64) -> ReLU
    h1 = jnp.dot(x, w1_ref[...], preferred_element_type=jnp.float32) + b1_ref[...]
    h1 = jnp.maximum(h1, 0.0).astype(jnp.bfloat16)
    h2 = jnp.dot(h1, w2_ref[...], preferred_element_type=jnp.float32) + b2_ref[...]
    h2 = jnp.maximum(h2, 0.0).astype(jnp.bfloat16)                   # (TM, 64)

    # fused heads: one MXU pass, one lane-dense (TM, 128) output slab.
    # tanh on the negotiation columns is done on the (B, 10) slice in the
    # wrapper (cheaper than tanh over all 128 lanes here).
    out_ref[...] = (
        jnp.dot(h2, wh_ref[...], preferred_element_type=jnp.float32) + bh_ref[...]
    )


def _round_up8(n):
    return max(8, ((n + 7) // 8) * 8)


def _choose_tm(batch):
    """Pick the batch tile height.

    Large tiles (up to 1024) amortize per-grid-step overhead; for mid-size
    batches we force >= 2 grid steps so the "parallel" axis can shard across
    v7x's 2 TensorCores (no-op on v5e/v6e).
    """
    b8 = _round_up8(batch)
    if b8 <= 8:
        return 8
    tm = min(1024, b8)
    if pl.cdiv(b8, tm) < 2:                 # single step -> split in two
        tm = _round_up8(b8 // 2)
    return tm


# ----------------------------------------------------------------------------
# One-time parameter packing: fused (64, 128) head, bf16 weights, f32 biases.
# ----------------------------------------------------------------------------
def prepare_params(params, action_space):
    (w1, b1, w2, b2, wp, bp, wv, bv, wn, bn) = params
    assert action_space + 1 + NEGO_DIM <= HEAD_OUT

    wh = jnp.zeros((64, HEAD_OUT), jnp.float32)
    wh = wh.at[:, :action_space].set(wp)
    wh = wh.at[:, action_space:action_space + 1].set(wv)
    wh = wh.at[:, action_space + 1:action_space + 1 + NEGO_DIM].set(wn)
    bh = jnp.zeros((1, HEAD_OUT), jnp.float32)
    bh = bh.at[:, :action_space].set(bp)
    bh = bh.at[:, action_space:action_space + 1].set(bv)
    bh = bh.at[:, action_space + 1:action_space + 1 + NEGO_DIM].set(bn)

    return (w1.astype(jnp.bfloat16), b1.astype(jnp.float32),
            w2.astype(jnp.bfloat16), b2.astype(jnp.float32),
            wh.astype(jnp.bfloat16), bh.astype(jnp.float32))


@functools.partial(jax.jit, static_argnames=("action_space",))
def mlp_forward_pallas(states, packed, action_space):
    """states: (B, state_space) f32 -> (logits (B,A), value (B,1), nego (B,10))."""
    B, S = states.shape
    (w1, b1, w2, b2, wh, bh) = packed

    TM = _choose_tm(B)
    B_pad = int(pl.cdiv(B, TM)) * TM
    x = states if B_pad == B else jnp.pad(states, ((0, B_pad - B), (0, 0)))

    grid = (B_pad // TM,)

    def _full(shape):
        # whole-array block (weights / biases), same tile for every grid step
        return pl.BlockSpec(shape, lambda i: tuple(0 for _ in shape))

    out = pl.pallas_call(
        _mlp_fused_kernel,
        out_shape=jax.ShapeDtypeStruct((B_pad, HEAD_OUT), jnp.float32),
        grid=grid,
        in_specs=[
            pl.BlockSpec((TM, S), lambda i: (i, 0)),   # batched input tile
            _full(w1.shape), _full(b1.shape),
            _full(w2.shape), _full(b2.shape),
            _full(wh.shape), _full(bh.shape),
        ],
        out_specs=pl.BlockSpec((TM, HEAD_OUT), lambda i: (i, 0)),
        compiler_params=pltpu.CompilerParams(
            dimension_semantics=("parallel",),          # use both TCs on v7x
        ),
    )(x, w1, b1, w2, b2, wh, bh)

    logits = out[:B, :action_space]
    value = out[:B, action_space:action_space + 1]
    nego = jnp.tanh(out[:B, action_space + 1:action_space + 1 + NEGO_DIM])
    return logits, value, nego


# ----------------------------------------------------------------------------
# Parameter init (mimics PyTorch Linear default U(-k, k)); weights are (in, out)
# ----------------------------------------------------------------------------
def _init_linear(key, fan_in, fan_out):
    kw, kb = jax.random.split(key)
    k = 1.0 / jnp.sqrt(jnp.float32(fan_in))
    w = jax.random.uniform(kw, (fan_in, fan_out), jnp.float32, -k, k)
    b = jax.random.uniform(kb, (1, fan_out), jnp.float32, -k, k)
    return w, b


def init_params(key, state_space, action_space):
    keys = jax.random.split(key, 5)
    w1, b1 = _init_linear(keys[0], state_space, state_space)   # mlp[0]
    w2, b2 = _init_linear(keys[1], state_space, 64)            # mlp[2]
    wp, bp = _init_linear(keys[2], 64, action_space)           # policy
    wv, bv = _init_linear(keys[3], 64, 1)                      # value
    wn, bn = _init_linear(keys[4], 64, NEGO_DIM)               # negotiation
    return (w1, b1, w2, b2, wp, bp, wv, bv, wn, bn)


# ----------------------------------------------------------------------------
# forward() glue from the PyTorch module: negotiation gather + concat (static)
# ----------------------------------------------------------------------------
def build_state(obs, nego_msgs, agent_id, negotiation_map):
    """obs: (obs_dim,), nego_msgs: (5, 10) -> state (obs_dim + 40,)."""
    dummy = jnp.zeros((NEGO_DIM,), jnp.float32)
    pieces = []
    for i in range(5):
        if i == agent_id:
            continue
        elif i in negotiation_map[agent_id]:
            pieces.append(nego_msgs[i])
        else:
            pieces.append(dummy)
    negotiation = jnp.concatenate(pieces) if pieces else jnp.zeros((0,), jnp.float32)
    return jnp.concatenate([obs, negotiation], axis=-1)


# ----------------------------------------------------------------------------
# Pure-JAX f32 reference (same math, for a correctness check)
# ----------------------------------------------------------------------------
def _reference_forward(states, params, action_space):
    (w1, b1, w2, b2, wp, bp, wv, bv, wn, bn) = params
    h1 = jnp.maximum(states @ w1 + b1, 0.0)
    h2 = jnp.maximum(h1 @ w2 + b2, 0.0)
    logits = h2 @ wp + bp
    value = h2 @ wv + bv
    nego = jnp.tanh(h2 @ wn + bn)
    return logits, value, nego


if __name__ == "__main__":
    # obs_dim=24, 4 other agents x 10 nego dims -> state_space = 64
    obs_dim = 24
    state_space = obs_dim + 4 * NEGO_DIM          # 64
    action_space = 8
    negotiation_map = {0: [1, 3], 1: [0], 2: [], 3: [0, 4], 4: [2]}

    key = jax.random.PRNGKey(0)
    k_obs, k_nego, k_params, k_big = jax.random.split(key, 4)

    obs = jax.random.normal(k_obs, (5, obs_dim), jnp.float32)          # per-agent obs
    nego_msgs = jax.random.normal(k_nego, (5, NEGO_DIM), jnp.float32)  # data[1]

    params = init_params(k_params, state_space, action_space)
    packed = prepare_params(params, action_space)   # one-time packing (bf16 weights)

    # Build all 5 agent states and run them through ONE batched pallas_call.
    states = jnp.stack(
        [build_state(obs[a], nego_msgs, a, negotiation_map) for a in range(5)]
    )                                                                  # (5, 64)

    logits, value, nego = mlp_forward_pallas(states, packed, action_space)
    jax.block_until_ready((logits, value, nego))

    assert logits.shape == (5, action_space)
    assert value.shape == (5, 1)
    assert nego.shape == (5, NEGO_DIM)

    # bf16 MXU operands -> relaxed tolerance vs the f32 reference.
    ref_logits, ref_value, ref_nego = _reference_forward(states, params, action_space)
    assert jnp.allclose(logits, ref_logits, atol=5e-2, rtol=5e-2)
    assert jnp.allclose(value, ref_value, atol=5e-2, rtol=5e-2)
    assert jnp.allclose(nego, ref_nego, atol=5e-2, rtol=5e-2)

    # Multi-tile path (grid >= 2 steps, exercises the "parallel" batch axis).
    big_states = jax.random.normal(k_big, (24, state_space), jnp.float32)
    b_logits, b_value, b_nego = mlp_forward_pallas(big_states, packed, action_space)
    jax.block_until_ready((b_logits, b_value, b_nego))
    r_logits, r_value, r_nego = _reference_forward(big_states, params, action_space)
    assert jnp.allclose(b_logits, r_logits, atol=5e-2, rtol=5e-2)
    assert jnp.allclose(b_value, r_value, atol=5e-2, rtol=5e-2)
    assert jnp.allclose(b_nego, r_nego, atol=5e-2, rtol=5e-2)

    print("KERNEL_OK")
</pallas_src>

<mosaic_0001>
module attributes {stable_mosaic.version = 11 : i64} {
  func.func @_mlp_fused_kernel(%arg0: i32, %arg1: memref<8x64xf32, #tpu.memory_space<vmem>>, %arg2: memref<64x64xbf16, #tpu.memory_space<vmem>>, %arg3: memref<1x64xf32, #tpu.memory_space<vmem>>, %arg4: memref<64x64xbf16, #tpu.memory_space<vmem>>, %arg5: memref<1x64xf32, #tpu.memory_space<vmem>>, %arg6: memref<64x128xbf16, #tpu.memory_space<vmem>>, %arg7: memref<1x128xf32, #tpu.memory_space<vmem>>, %arg8: memref<8x128xf32, #tpu.memory_space<vmem>>) attributes {dimension_semantics = [#tpu.dimension_semantics<parallel>], iteration_bounds = array<i64: 1>, scalar_prefetch = 0 : i64, scratch_operands = 0 : i64, tpu.core_type = #tpu.core_type<tc>, window_params = [{transform_indices = @transform_0, window_bounds = array<i64: 8, 64>}, {pipeline_mode = #tpu.pipeline_mode<synchronous>, transform_indices = @transform_1, window_bounds = array<i64: 64, 64>}, {pipeline_mode = #tpu.pipeline_mode<synchronous>, transform_indices = @transform_2, window_bounds = array<i64: 1, 64>}, {pipeline_mode = #tpu.pipeline_mode<synchronous>, transform_indices = @transform_3, window_bounds = array<i64: 64, 64>}, {pipeline_mode = #tpu.pipeline_mode<synchronous>, transform_indices = @transform_4, window_bounds = array<i64: 1, 64>}, {pipeline_mode = #tpu.pipeline_mode<synchronous>, transform_indices = @transform_5, window_bounds = array<i64: 64, 128>}, {pipeline_mode = #tpu.pipeline_mode<synchronous>, transform_indices = @transform_6, window_bounds = array<i64: 1, 128>}, {transform_indices = @transform_7, window_bounds = array<i64: 8, 128>}]} {
    %c0 = arith.constant 0 : index
    %c0_0 = arith.constant 0 : index
    %0 = vector.load %arg1[%c0, %c0_0] : memref<8x64xf32, #tpu.memory_space<vmem>>, vector<8x64xf32>
    %1 = arith.truncf %0 : vector<8x64xf32> to vector<8x64xbf16>
    %c0_1 = arith.constant 0 : index
    %c0_2 = arith.constant 0 : index
    %2 = vector.load %arg2[%c0_1, %c0_2] : memref<64x64xbf16, #tpu.memory_space<vmem>>, vector<64x64xbf16>
    %cst = arith.constant dense<0.000000e+00> : vector<8x64xf32>
    %3 = tpu.matmul %1, %2, %cst {dimension_numbers = #tpu.dot_dimension_numbers<[1], [0], [0], [1], [0, 0, 1, 1], [], []>} : vector<8x64xbf16>, vector<64x64xbf16>, vector<8x64xf32> -> vector<8x64xf32>
    %c0_3 = arith.constant 0 : index
    %c0_4 = arith.constant 0 : index
    %4 = vector.load %arg3[%c0_3, %c0_4] : memref<1x64xf32, #tpu.memory_space<vmem>>, vector<1x64xf32>
    %5 = vector.broadcast %4 : vector<1x64xf32> to vector<8x64xf32>
    %6 = arith.addf %3, %5 : vector<8x64xf32>
    %cst_5 = arith.constant 0.000000e+00 : f32
    %7 = vector.broadcast %cst_5 : f32 to vector<8x64xf32>
    %8 = arith.maximumf %6, %7 : vector<8x64xf32>
    %9 = arith.truncf %8 : vector<8x64xf32> to vector<8x64xbf16>
    %c0_6 = arith.constant 0 : index
    %c0_7 = arith.constant 0 : index
    %10 = vector.load %arg4[%c0_6, %c0_7] : memref<64x64xbf16, #tpu.memory_space<vmem>>, vector<64x64xbf16>
    %cst_8 = arith.constant dense<0.000000e+00> : vector<8x64xf32>
    %11 = tpu.matmul %9, %10, %cst_8 {dimension_numbers = #tpu.dot_dimension_numbers<[1], [0], [0], [1], [0, 0, 1, 1], [], []>} : vector<8x64xbf16>, vector<64x64xbf16>, vector<8x64xf32> -> vector<8x64xf32>
    %c0_9 = arith.constant 0 : index
    %c0_10 = arith.constant 0 : index
    %12 = vector.load %arg5[%c0_9, %c0_10] : memref<1x64xf32, #tpu.memory_space<vmem>>, vector<1x64xf32>
    %13 = vector.broadcast %12 : vector<1x64xf32> to vector<8x64xf32>
    %14 = arith.addf %11, %13 : vector<8x64xf32>
    %cst_11 = arith.constant 0.000000e+00 : f32
    %15 = vector.broadcast %cst_11 : f32 to vector<8x64xf32>
    %16 = arith.maximumf %14, %15 : vector<8x64xf32>
    %17 = arith.truncf %16 : vector<8x64xf32> to vector<8x64xbf16>
    %c0_12 = arith.constant 0 : index
    %c0_13 = arith.constant 0 : index
    %18 = vector.load %arg6[%c0_12, %c0_13] : memref<64x128xbf16, #tpu.memory_space<vmem>>, vector<64x128xbf16>
    %cst_14 = arith.constant dense<0.000000e+00> : vector<8x128xf32>
    %19 = tpu.matmul %17, %18, %cst_14 {dimension_numbers = #tpu.dot_dimension_numbers<[1], [0], [0], [1], [0, 0, 1, 1], [], []>} : vector<8x64xbf16>, vector<64x128xbf16>, vector<8x128xf32> -> vector<8x128xf32>
    %c0_15 = arith.constant 0 : index
    %c0_16 = arith.constant 0 : index
    %20 = vector.load %arg7[%c0_15, %c0_16] : memref<1x128xf32, #tpu.memory_space<vmem>>, vector<1x128xf32>
    %21 = vector.broadcast %20 : vector<1x128xf32> to vector<8x128xf32>
    %22 = arith.addf %19, %21 : vector<8x128xf32>
    %c0_17 = arith.constant 0 : index
    %c0_18 = arith.constant 0 : index
    %23 = vector.load %arg8[%c0_17, %c0_18] : memref<8x128xf32, #tpu.memory_space<vmem>>, vector<8x128xf32>
    tpu.vector_store %arg8[%c0_17, %c0_18], %22 {strides = array<i32>} : memref<8x128xf32, #tpu.memory_space<vmem>>, vector<8x128xf32>,
    return
  }
  func.func @transform_0(%arg0: i32) -> (i32, i32) {
    %c0_i32 = arith.constant 0 : i32
    %c0_i32_0 = arith.constant 0 : i32
    return %arg0, %c0_i32 : i32, i32
  }
  func.func @transform_1(%arg0: i32) -> (i32, i32) {
    %c0_i32 = arith.constant 0 : i32
    %c0_i32_0 = arith.constant 0 : i32
    %c0_i32_1 = arith.constant 0 : i32
    return %c0_i32, %c0_i32_0 : i32, i32
  }
  func.func @transform_2(%arg0: i32) -> (i32, i32) {
    %c0_i32 = arith.constant 0 : i32
    %c0_i32_0 = arith.constant 0 : i32
    %c0_i32_1 = arith.constant 0 : i32
    return %c0_i32, %c0_i32_0 : i32, i32
  }
  func.func @transform_3(%arg0: i32) -> (i32, i32) {
    %c0_i32 = arith.constant 0 : i32
    %c0_i32_0 = arith.constant 0 : i32
    %c0_i32_1 = arith.constant 0 : i32
    return %c0_i32, %c0_i32_0 : i32, i32
  }
  func.func @transform_4(%arg0: i32) -> (i32, i32) {
    %c0_i32 = arith.constant 0 : i32
    %c0_i32_0 = arith.constant 0 : i32
    %c0_i32_1 = arith.constant 0 : i32
    return %c0_i32, %c0_i32_0 : i32, i32
  }
  func.func @transform_5(%arg0: i32) -> (i32, i32) {
    %c0_i32 = arith.constant 0 : i32
    %c0_i32_0 = arith.constant 0 : i32
    %c0_i32_1 = arith.constant 0 : i32
    return %c0_i32, %c0_i32_0 : i32, i32
  }
  func.func @transform_6(%arg0: i32) -> (i32, i32) {
    %c0_i32 = arith.constant 0 : i32
    %c0_i32_0 = arith.constant 0 : i32
    %c0_i32_1 = arith.constant 0 : i32
    return %c0_i32, %c0_i32_0 : i32, i32
  }
  func.func @transform_7(%arg0: i32) -> (i32, i32) {
    %c0_i32 = arith.constant 0 : i32
    %c0_i32_0 = arith.constant 0 : i32
    return %arg0, %c0_i32 : i32, i32
  }
}

</mosaic_0001>

<llo_original>
// kernel: mlp_forward_pallas.1
$region0: #{mlp_forward_pallas.1}
  #allocation0 [shape = 'u32[]', space=smem, size = 0x4, offset = 0x4, fixed_abs, tag = 'smem constant byte address 0x4 - core index']
  #allocation1 [shape = 'u32[144,128]{1,0:T(1,128)}', space=vmem, size = 0x12000, scoped, tag = 'internal scratch']
  %s0 = inlined_call_operand.vmem [shape: f32[8,64], index: 0, kind: input, shape index: {}]
  %s1 = inlined_call_operand.vmem [shape: bf16[64,64], index: 1, kind: input, shape index: {}]
  %s2 = inlined_call_operand.vmem [shape: f32[1,64], index: 2, kind: input, shape index: {}]
  %s3 = inlined_call_operand.hbm [shape: bf16[64,64], index: 3, kind: input, shape index: {}]
  %s4 = inlined_call_operand.vmem [shape: f32[1,64], index: 4, kind: input, shape index: {}]
  %s5 = inlined_call_operand.hbm [shape: bf16[64,128], index: 5, kind: input, shape index: {}]
  %s6 = inlined_call_operand.vmem [shape: f32[1,128], index: 6, kind: input, shape index: {}]
  %s7 = inlined_call_operand.vmem [shape: f32[8,128], index: 7, kind: output, shape index: {}]
  %s8 = sld [smem:[#allocation0]]
  $region46: #{mlp_forward_pallas.1} parent=0
    _
  %s10 = ssub.s32 1, %s8
  %s11 = scalar_select 0, %s10, %s8
  $region1: #{mlp_forward_pallas.1} parent=0
    #allocation2 [shape = 'u8[16384]{0}', space=vmem, size = 0x4000, scoped, tag = 'input window, operand 3, single buffered']
    #allocation3 [shape = 's32[1]{0}', space=sflag, size = 0x4, scoped, tag = 'scoped memory for mlp_forward_pallas.1']
    #allocation4 [shape = 'u8[16384]{0}', space=vmem, size = 0x4000, scoped, tag = 'input window, operand 5, single buffered']
    #allocation5 [shape = 's32[1]{0}', space=sflag, size = 0x4, scoped, tag = 'scoped memory for mlp_forward_pallas.1']
    %12 = vsyncpa [#allocation3], 0
    %13 = vsyncpa [#allocation5], 0
    // Predicated region
    $region2: #{mlp_forward_pallas.1} parent=1 // pred_check
      _
    $region3: #{mlp_forward_pallas.1} parent=1 // pred_check_branch
      %15 = sbr.rel (0) target = $region5
    $region4: #{mlp_forward_pallas.1} parent=1 // pred_region
      _
    $region5: #{mlp_forward_pallas.1} parent=1 // pred_fallthru
      _
    // Predicated region
    $region6: #{mlp_forward_pallas.1} parent=1 // pred_check
      _
    $region7: #{mlp_forward_pallas.1} parent=1 // pred_check_branch
      %17 = sbr.rel (0) target = $region9
    $region8: #{mlp_forward_pallas.1} parent=1 // pred_region
      _
    $region9: #{mlp_forward_pallas.1} parent=1 // pred_fallthru
      _
    // Predicated region
    $region10: #{mlp_forward_pallas.1} parent=1 // pred_check
      _
    $region11: #{mlp_forward_pallas.1} parent=1 // pred_check_branch
      %19 = sbr.rel (0) target = $region13
    $region12: #{mlp_forward_pallas.1} parent=1 // pred_region
      _
    $region13: #{mlp_forward_pallas.1} parent=1 // pred_fallthru
      _
    // Predicated region
    $region14: #{mlp_forward_pallas.1} parent=1 // pred_check
      _
    $region15: #{mlp_forward_pallas.1} parent=1 // pred_check_branch
      %21 = sbr.rel (0) target = $region17
    $region16: #{mlp_forward_pallas.1} parent=1 // pred_region
      %s23 = ssub.s32 512, 512
      %24 = vsyncadd [#allocation3], %s23
      %s25 = sshll.u32 [#allocation2], 4
      %s26 = int_to_ptr.vmem [resolvable:$true] %s25
      %31 = dma.hbm_to_vmem [thread:$0]  %s3, 512, %s26, [#allocation3], 64, 64, 4
    $region17: #{mlp_forward_pallas.1} parent=1 // pred_fallthru
      _
    // Predicated region
    $region18: #{mlp_forward_pallas.1} parent=1 // pred_check
      _
    $region19: #{mlp_forward_pallas.1} parent=1 // pred_check_branch
      %33 = sbr.rel (0) target = $region21
    $region20: #{mlp_forward_pallas.1} parent=1 // pred_region
      _
    $region21: #{mlp_forward_pallas.1} parent=1 // pred_fallthru
      _
    // Predicated region
    $region22: #{mlp_forward_pallas.1} parent=1 // pred_check
      _
    $region23: #{mlp_forward_pallas.1} parent=1 // pred_check_branch
      %35 = sbr.rel (0) target = $region25
    $region24: #{mlp_forward_pallas.1} parent=1 // pred_region
      %s37 = ssub.s32 512, 512
      %38 = vsyncadd [#allocation5], %s37
      %s39 = sshll.u32 [#allocation4], 4
      %s40 = int_to_ptr.vmem [resolvable:$true] %s39
      %45 = dma.hbm_to_vmem [thread:$0]  %s5, 512, %s40, [#allocation5], 64, 64, 4
    $region25: #{mlp_forward_pallas.1} parent=1 // pred_fallthru
      _
    // Predicated region
    $region26: #{mlp_forward_pallas.1} parent=1 // pred_check
      _
    $region27: #{mlp_forward_pallas.1} parent=1 // pred_check_branch
      %47 = sbr.rel (0) target = $region29
    $region28: #{mlp_forward_pallas.1} parent=1 // pred_region
      _
    $region29: #{mlp_forward_pallas.1} parent=1 // pred_fallthru
      _
    // Predicated region
    $region30: #{mlp_forward_pallas.1} parent=1 // pred_check
      _
    $region31: #{mlp_forward_pallas.1} parent=1 // pred_check_branch
      %49 = sbr.rel (0) target = $region33
    $region32: #{mlp_forward_pallas.1} parent=1 // pred_region
      %50 = dma.done [#allocation3], 512
    $region33: #{mlp_forward_pallas.1} parent=1 // pred_fallthru
      _
    // Predicated region
    $region34: #{mlp_forward_pallas.1} parent=1 // pred_check
      _
    $region35: #{mlp_forward_pallas.1} parent=1 // pred_check_branch
      %52 = sbr.rel (0) target = $region37
    $region36: #{mlp_forward_pallas.1} parent=1 // pred_region
      %53 = dma.done [#allocation5], 512
    $region37: #{mlp_forward_pallas.1} parent=1 // pred_fallthru
      _
    %v55 = vld [vmem:[%s0] sm:$0xff]
    %v56 = vpack.c.bf16 %v55, %v55
    %v57 = vld [vmem:[%s1] sm:$0xf]
    %v58 = vld [vmem:[%s1 + $0x4] sm:$0xf]
    %v59 = vld [vmem:[%s1 + $0x8] sm:$0xf]
    %v60 = vld [vmem:[%s1 + $0xc] sm:$0xf]
    %v61 = vld [vmem:[%s1 + $0x10] sm:$0xf]
    %v62 = vld [vmem:[%s1 + $0x14] sm:$0xf]
    %v63 = vld [vmem:[%s1 + $0x18] sm:$0xf]
    %v64 = vld [vmem:[%s1 + $0x1c] sm:$0xf]
    %v65 = vld [vmem:[%s2] sm:$0x1]
    %v67 = vlaneseq
    %v68 = vshrl.u32 %v67, 7
    %v69 = vsub.s32 0, %v68
    %v70 = vrot.slane %v65, %v69
    %v80 = vunpack.c.l.b16 %v57
    %v81 = vunpack.c.l.b16 %v58
    %v82 = vunpack.c.l.b16 %v59
    %v83 = vunpack.c.l.b16 %v60
    %v84 = vunpack.c.l.b16 %v61
    %v85 = vunpack.c.l.b16 %v62
    %v86 = vunpack.c.l.b16 %v63
    %v87 = vunpack.c.l.b16 %v64
    %v88 = vpack.c.b16 %v81, %v80
    %v89 = vpack.c.b16 %v83, %v82
    %v90 = vpack.c.b16 %v85, %v84
    %v91 = vpack.c.b16 %v87, %v86
    %vm96 = vcmask 523264
    %v98 = vsel %vm96, %v56, 0
    %100 = vmatprep.subr.bf16.mxu0 0
    %101 = vmatpush1.bf16.msra.mxu0 %v88
    %102 = vmatprep.subr.bf16.mxu0 0
    %103 = vmatpush1.bf16.msra.mxu0 %v89
    %104 = vmatprep.subr.bf16.mxu0 0
    %105 = vmatpush1.bf16.msra.mxu0 %v90
    %106 = vmatprep.subr.bf16.mxu0 0
    %107 = vmatpush1.bf16.msra.mxu0 %v91
    %108 = vmatprep.subr.bf16.mxu0 0
    %109 = vmatpush1.bf16.msra.mxu0 0
    %110 = vmatprep.subr.bf16.mxu0 0
    %111 = vmatpush1.bf16.msra.mxu0 0
    %112 = vmatprep.subr.bf16.mxu0 0
    %113 = vmatpush1.bf16.msra.mxu0 0
    %114 = vmatprep.subr.bf16.mxu0 0
    %115 = vmatpush1.bf16.msra.mxu0 0
    %116 = vmatprep.subr.bf16.mxu0 0
    %117 = vmatpush1.bf16.msra.mxu0 0
    %118 = vmatprep.subr.bf16.mxu0 0
    %119 = vmatpush1.bf16.msra.mxu0 0
    %120 = vmatprep.subr.bf16.mxu0 0
    %121 = vmatpush1.bf16.msra.mxu0 0
    %122 = vmatprep.subr.bf16.mxu0 0
    %123 = vmatpush1.bf16.msra.mxu0 0
    %124 = vmatprep.subr.bf16.mxu0 0
    %125 = vmatpush1.bf16.msra.mxu0 0
    %126 = vmatprep.subr.bf16.mxu0 0
    %127 = vmatpush1.bf16.msra.mxu0 0
    %128 = vmatprep.subr.bf16.mxu0 0
    %129 = vmatpush1.bf16.msra.mxu0 0
    %130 = vmatprep.subr.bf16.mxu0 0
    %131 = vmatpush1.bf16.msra.mxu0 0
    %132 = vmatprep.mubr.bf16.mxu0 0
    %133 = vmatmul.mubr.bf16.gmra.mrb[0].mxu0 %v98
    %v134 = vpop.f32.mrb[0].mxu0
    %v135 = vadd.f32 %v70, %v134
    %v136 = vpop.f32.mrb[0].mxu0
    %v137 = vpop.f32.mrb[0].mxu0
    %v138 = vpop.f32.mrb[0].mxu0
    %139 = vdwg.mxu0
    %v140 = vmax.f32 %v135, 0.0
    %v141 = vpack.c.bf16 %v140, %v140
    %v142 = vld [vmem:[#allocation2] sm:$0xf]
    %v143 = vld [vmem:[#allocation2 + $0x4] sm:$0xf]
    %v144 = vld [vmem:[#allocation2 + $0x8] sm:$0xf]
    %v145 = vld [vmem:[#allocation2 + $0xc] sm:$0xf]
    %v146 = vld [vmem:[#allocation2 + $0x10] sm:$0xf]
    %v147 = vld [vmem:[#allocation2 + $0x14] sm:$0xf]
    %v148 = vld [vmem:[#allocation2 + $0x18] sm:$0xf]
    %v149 = vld [vmem:[#allocation2 + $0x1c] sm:$0xf]
    %v150 = vld [vmem:[%s4] sm:$0x1]
    %v152 = vlaneseq
    %v153 = vshrl.u32 %v152, 7
    %v154 = vsub.s32 0, %v153
    %v155 = vrot.slane %v150, %v154
    %v165 = vunpack.c.l.b16 %v142
    %v166 = vunpack.c.l.b16 %v143
    %v167 = vunpack.c.l.b16 %v144
    %v168 = vunpack.c.l.b16 %v145
    %v169 = vunpack.c.l.b16 %v146
    %v170 = vunpack.c.l.b16 %v147
    %v171 = vunpack.c.l.b16 %v148
    %v172 = vunpack.c.l.b16 %v149
    %v173 = vpack.c.b16 %v166, %v165
    %v174 = vpack.c.b16 %v168, %v167
    %v175 = vpack.c.b16 %v170, %v169
    %v176 = vpack.c.b16 %v172, %v171
    %v182 = vsel %vm96, %v141, 0
    %184 = vmatprep.subr.bf16.mxu0 0
    %185 = vmatpush1.bf16.msra.mxu0 %v173
    %186 = vmatprep.subr.bf16.mxu0 0
    %187 = vmatpush1.bf16.msra.mxu0 %v174
    %188 = vmatprep.subr.bf16.mxu0 0
    %189 = vmatpush1.bf16.msra.mxu0 %v175
    %190 = vmatprep.subr.bf16.mxu0 0
    %191 = vmatpush1.bf16.msra.mxu0 %v176
    %192 = vmatprep.subr.bf16.mxu0 0
    %193 = vmatpush1.bf16.msra.mxu0 0
    %194 = vmatprep.subr.bf16.mxu0 0
    %195 = vmatpush1.bf16.msra.mxu0 0
    %196 = vmatprep.subr.bf16.mxu0 0
    %197 = vmatpush1.bf16.msra.mxu0 0
    %198 = vmatprep.subr.bf16.mxu0 0
    %199 = vmatpush1.bf16.msra.mxu0 0
    %200 = vmatprep.subr.bf16.mxu0 0
    %201 = vmatpush1.bf16.msra.mxu0 0
    %202 = vmatprep.subr.bf16.mxu0 0
    %203 = vmatpush1.bf16.msra.mxu0 0
    %204 = vmatprep.subr.bf16.mxu0 0
    %205 = vmatpush1.bf16.msra.mxu0 0
    %206 = vmatprep.subr.bf16.mxu0 0
    %207 = vmatpush1.bf16.msra.mxu0 0
    %208 = vmatprep.subr.bf16.mxu0 0
    %209 = vmatpush1.bf16.msra.mxu0 0
    %210 = vmatprep.subr.bf16.mxu0 0
    %211 = vmatpush1.bf16.msra.mxu0 0
    %212 = vmatprep.subr.bf16.mxu0 0
    %213 = vmatpush1.bf16.msra.mxu0 0
    %214 = vmatprep.subr.bf16.mxu0 0
    %215 = vmatpush1.bf16.msra.mxu0 0
    %216 = vmatprep.mubr.bf16.mxu0 0
    %217 = vmatmul.mubr.bf16.gmra.mrb[0].mxu0 %v182
    %v218 = vpop.f32.mrb[0].mxu0
    %v219 = vadd.f32 %v155, %v218
    %v220 = vpop.f32.mrb[0].mxu0
    %v221 = vpop.f32.mrb[0].mxu0
    %v222 = vpop.f32.mrb[0].mxu0
    %223 = vdwg.mxu0
    %v224 = vmax.f32 %v219, 0.0
    %v225 = vpack.c.bf16 %v224, %v224
    %v226 = vld [vmem:[#allocation4] sm:$0xf]
    %v227 = vld [vmem:[#allocation4 + $0x4] sm:$0xf]
    %v228 = vld [vmem:[#allocation4 + $0x8] sm:$0xf]
    %v229 = vld [vmem:[#allocation4 + $0xc] sm:$0xf]
    %v230 = vld [vmem:[#allocation4 + $0x10] sm:$0xf]
    %v231 = vld [vmem:[#allocation4 + $0x14] sm:$0xf]
    %v232 = vld [vmem:[#allocation4 + $0x18] sm:$0xf]
    %v233 = vld [vmem:[#allocation4 + $0x1c] sm:$0xf]
    %v234 = vld [vmem:[%s6] sm:$0x1]
    %v236 = vlaneseq
    %v237 = vshrl.u32 %v236, 7
    %v238 = vsub.s32 0, %v237
    %v239 = vrot.slane %v234, %v238
    %v249 = vunpack.c.l.b16 %v226
    %v250 = vunpack.c.l.b16 %v227
    %v251 = vunpack.c.l.b16 %v228
    %v252 = vunpack.c.l.b16 %v229
    %v253 = vunpack.c.l.b16 %v230
    %v254 = vunpack.c.l.b16 %v231
    %v255 = vunpack.c.l.b16 %v232
    %v256 = vunpack.c.l.b16 %v233
    %v257 = vpack.c.b16 %v250, %v249
    %v258 = vpack.c.b16 %v252, %v251
    %v259 = vpack.c.b16 %v254, %v253
    %v260 = vpack.c.b16 %v256, %v255
    %v266 = vsel %vm96, %v225, 0
    %268 = vmatprep.subr.bf16.mxu0 0
    %269 = vmatpush1.bf16.msra.mxu0 %v257
    %270 = vmatprep.subr.bf16.mxu0 0
    %271 = vmatpush1.bf16.msra.mxu0 %v258
    %272 = vmatprep.subr.bf16.mxu0 0
    %273 = vmatpush1.bf16.msra.mxu0 %v259
    %274 = vmatprep.subr.bf16.mxu0 0
    %275 = vmatpush1.bf16.msra.mxu0 %v260
    %276 = vmatprep.subr.bf16.mxu0 0
    %277 = vmatpush1.bf16.msra.mxu0 0
    %278 = vmatprep.subr.bf16.mxu0 0
    %279 = vmatpush1.bf16.msra.mxu0 0
    %280 = vmatprep.subr.bf16.mxu0 0
    %281 = vmatpush1.bf16.msra.mxu0 0
    %282 = vmatprep.subr.bf16.mxu0 0
    %283 = vmatpush1.bf16.msra.mxu0 0
    %284 = vmatprep.subr.bf16.mxu0 0
    %285 = vmatpush1.bf16.msra.mxu0 0
    %286 = vmatprep.subr.bf16.mxu0 0
    %287 = vmatpush1.bf16.msra.mxu0 0
    %288 = vmatprep.subr.bf16.mxu0 0
    %289 = vmatpush1.bf16.msra.mxu0 0
    %290 = vmatprep.subr.bf16.mxu0 0
    %291 = vmatpush1.bf16.msra.mxu0 0
    %292 = vmatprep.subr.bf16.mxu0 0
    %293 = vmatpush1.bf16.msra.mxu0 0
    %294 = vmatprep.subr.bf16.mxu0 0
    %295 = vmatpush1.bf16.msra.mxu0 0
    %296 = vmatprep.subr.bf16.mxu0 0
    %297 = vmatpush1.bf16.msra.mxu0 0
    %298 = vmatprep.subr.bf16.mxu0 0
    %299 = vmatpush1.bf16.msra.mxu0 0
    %300 = vmatprep.mubr.bf16.mxu0 0
    %301 = vmatmul.mubr.bf16.gmra.mrb[0].mxu0 %v266
    %v302 = vpop.f32.mrb[0].mxu0
    %v303 = vadd.f32 %v239, %v302
    %v304 = vpop.f32.mrb[0].mxu0
    %v305 = vpop.f32.mrb[0].mxu0
    %v306 = vpop.f32.mrb[0].mxu0
    %307 = vdwg.mxu0
    %308 = vst [vmem:[%s7] sm:$0xff] %v303
    // Predicated region
    $region38: #{mlp_forward_pallas.1} parent=1 // pred_check
      _
    $region39: #{mlp_forward_pallas.1} parent=1 // pred_check_branch
      %310 = sbr.rel (0) target = $region41
    $region40: #{mlp_forward_pallas.1} parent=1 // pred_region
      _
    $region41: #{mlp_forward_pallas.1} parent=1 // pred_fallthru
      _
    // Predicated region
    $region42: #{mlp_forward_pallas.1} parent=1 // pred_check
      _
    $region43: #{mlp_forward_pallas.1} parent=1 // pred_check_branch
      %312 = sbr.rel (0) target = $region45
    $region44: #{mlp_forward_pallas.1} parent=1 // pred_region
      _
    $region45: #{mlp_forward_pallas.1} parent=1 // pred_fallthru
      _
    %313 = vsyncpa [#allocation3], 1
    %314 = vsyncpa [#allocation5], 1

</llo_original>
